<compile_context>
chip_gen: v6e
topology: v6e:2x2x1
jax: 0.10.0
libtpu: 0.0.40
codegen_flags: <defaults>
</compile_context>

<pallas_src>
import jax
import jax.numpy as jnp
from jax.experimental import pallas as pl
from jax.experimental.pallas import tpu as pltpu


def imdb_head_kernel(x_ref, w1_ref, b1_ref, w2_ref, b2_ref, out_ref):
    # x: [bB, Dp]  w1: [Dp, Hp]  b1: [1, Hp]  w2: [Hp, Tp]  b2: [1, Tp]
    # out: [bB, Tp]   (Dp, Hp, Tp all multiples of 128 lanes)

    # fc1 + ReLU (MXU matmul, f32 accumulation; inputs may be f32 or bf16).
    h = jnp.dot(x_ref[...], w1_ref[...], preferred_element_type=jnp.float32)
    h = jnp.maximum(h + b1_ref[...].astype(jnp.float32), 0.0)

    # fc2 on the lane-padded target axis.
    logits = jnp.dot(h.astype(w2_ref.dtype), w2_ref[...],
                     preferred_element_type=jnp.float32)
    logits = logits + b2_ref[...].astype(jnp.float32)

    # Row softmax.  Padded target columns carry a huge negative bias, so their
    # exp() is exactly 0 and they do not perturb the real probabilities.
    m = jnp.max(logits, axis=-1, keepdims=True)
    e = jnp.exp(logits - m)
    denom = jnp.sum(e, axis=-1, keepdims=True)
    out_ref[...] = (e * pl.reciprocal(denom, approx=True)).astype(out_ref.dtype)


def _round_up(n, m):
    return ((n + m - 1) // m) * m


def imdb_model_forward(x, w1, b1, w2, b2, *, block_b=256):
    """Pooled BERT features x: [B, bert_dim] -> class probabilities [B, num_targets]."""
    B, D = x.shape
    H = w1.shape[1]
    T = w2.shape[1]
    LANE = 128
    SUBLANE = 8

    b1 = b1.reshape(1, H)
    b2 = b2.reshape(1, T)

    # ---- Lane padding (all exact under the model's math) -------------------
    # bert_dim: zero-pad x columns and w1 rows -> contraction unchanged.
    D_pad = _round_up(D, LANE)
    if D_pad != D:
        x = jnp.pad(x, ((0, 0), (0, D_pad - D)))
        w1 = jnp.pad(w1, ((0, D_pad - D), (0, 0)))

    # hidden_dim: zero-pad w1 cols, b1 cols, w2 rows -> relu(0)=0 and the zero
    # fc2 rows contribute nothing.
    H_pad = _round_up(H, LANE)
    if H_pad != H:
        w1 = jnp.pad(w1, ((0, 0), (0, H_pad - H)))
        b1 = jnp.pad(b1, ((0, 0), (0, H_pad - H)))
        w2 = jnp.pad(w2, ((0, H_pad - H), (0, 0)))

    # num_targets: zero-pad w2 cols; padded bias columns get -1e30 so their
    # logits vanish under softmax.  Output stores become full-lane vst.
    T_pad = _round_up(T, LANE)
    if T_pad != T:
        w2 = jnp.pad(w2, ((0, 0), (0, T_pad - T)))
        neg = jnp.full((1, T_pad - T), -1e30, dtype=b2.dtype)
        b2 = jnp.concatenate([b2, neg], axis=1)

    # ---- Batch grid ---------------------------------------------------------
    block_b = max(SUBLANE, min(block_b, _round_up(B, SUBLANE)))
    block_b = _round_up(block_b, SUBLANE)
    B_pad = _round_up(B, block_b)
    if B_pad != B:
        x = jnp.pad(x, ((0, B_pad - B), (0, 0)))

    grid = (B_pad // block_b,)
    const = lambda i: (0, 0)  # weights: same block every step -> VMEM-resident

    # Right-sized VMEM budget: double-buffered activation/output tiles plus
    # resident weights plus headroom for compiler scratch.
    itemsize = lambda a: jnp.dtype(a.dtype).itemsize
    tile_bytes = block_b * (D_pad * itemsize(x) + T_pad * 4)
    weight_bytes = (D_pad * H_pad * itemsize(w1) + H_pad * itemsize(b1)
                    + H_pad * T_pad * itemsize(w2) + T_pad * itemsize(b2))
    vmem_limit = int(2 * tile_bytes + 2 * weight_bytes + (8 << 20))

    out = pl.pallas_call(
        imdb_head_kernel,
        out_shape=jax.ShapeDtypeStruct((B_pad, T_pad), jnp.float32),
        grid=grid,
        in_specs=[
            pl.BlockSpec((block_b, D_pad), lambda i: (i, 0)),  # activations: streamed
            pl.BlockSpec((D_pad, H_pad), const),               # fc1 weight: resident
            pl.BlockSpec((1, H_pad), const),                   # fc1 bias
            pl.BlockSpec((H_pad, T_pad), const),               # fc2 weight (padded)
            pl.BlockSpec((1, T_pad), const),                   # fc2 bias (padded)
        ],
        out_specs=pl.BlockSpec((block_b, T_pad), lambda i: (i, 0)),
        compiler_params=pltpu.CompilerParams(
            dimension_semantics=("parallel",),  # v7x: shard batch across 2 TCs
            vmem_limit_bytes=vmem_limit,
        ),
    )(x, w1, b1, w2, b2)

    return out[:B, :T]


def reference_forward(x, w1, b1, w2, b2):
    h = jnp.maximum(x @ w1 + b1, 0.0)
    logits = h @ w2 + b2
    return jax.nn.softmax(logits, axis=-1)


if __name__ == "__main__":
    # Small shapes consistent with the module: pooled BERT features -> 2 classes.
    batch = 8
    bert_dim = 128
    hidden_dim = 64
    num_targets = 2

    key = jax.random.PRNGKey(0)
    kx, kw1, kb1, kw2, kb2 = jax.random.split(key, 5)

    # Deterministic synthetic parameters (shapes from nn.Linear in __init__),
    # stored pre-transposed as [in, out] so the kernel does row-major matmuls.
    x = jax.random.normal(kx, (batch, bert_dim), dtype=jnp.float32)
    w1 = jax.random.normal(kw1, (bert_dim, hidden_dim), dtype=jnp.float32) * 0.05
    b1 = jax.random.normal(kb1, (1, hidden_dim), dtype=jnp.float32) * 0.05
    w2 = jax.random.normal(kw2, (hidden_dim, num_targets), dtype=jnp.float32) * 0.05
    b2 = jax.random.normal(kb2, (1, num_targets), dtype=jnp.float32) * 0.05

    fwd = jax.jit(imdb_model_forward)
    probs = fwd(x, w1, b1, w2, b2)
    jax.block_until_ready(probs)

    ref = reference_forward(x, w1, b1, w2, b2)
    assert probs.shape == (batch, num_targets)
    # Tolerances account for the approximate (EUP) reciprocal in the softmax.
    assert jnp.allclose(probs, ref, atol=5e-3, rtol=5e-3)
    assert jnp.allclose(jnp.sum(probs, axis=-1), 1.0, atol=5e-3)

    print("KERNEL_OK")
</pallas_src>

<mosaic_0001>
module attributes {stable_mosaic.version = 11 : i64} {
  func.func @imdb_head_kernel(%arg0: i32, %arg1: memref<8x128xf32, #tpu.memory_space<vmem>>, %arg2: memref<128x128xf32, #tpu.memory_space<vmem>>, %arg3: memref<1x128xf32, #tpu.memory_space<vmem>>, %arg4: memref<128x128xf32, #tpu.memory_space<vmem>>, %arg5: memref<1x128xf32, #tpu.memory_space<vmem>>, %arg6: memref<8x128xf32, #tpu.memory_space<vmem>>) attributes {dimension_semantics = [#tpu.dimension_semantics<parallel>], iteration_bounds = array<i64: 1>, scalar_prefetch = 0 : i64, scratch_operands = 0 : i64, tpu.core_type = #tpu.core_type<tc>, window_params = [{transform_indices = @transform_0, window_bounds = array<i64: 8, 128>}, {pipeline_mode = #tpu.pipeline_mode<synchronous>, transform_indices = @transform_1, window_bounds = array<i64: 128, 128>}, {pipeline_mode = #tpu.pipeline_mode<synchronous>, transform_indices = @transform_2, window_bounds = array<i64: 1, 128>}, {pipeline_mode = #tpu.pipeline_mode<synchronous>, transform_indices = @transform_3, window_bounds = array<i64: 128, 128>}, {pipeline_mode = #tpu.pipeline_mode<synchronous>, transform_indices = @transform_4, window_bounds = array<i64: 1, 128>}, {transform_indices = @transform_5, window_bounds = array<i64: 8, 128>}]} {
    %c0 = arith.constant 0 : index
    %c0_0 = arith.constant 0 : index
    %0 = vector.load %arg1[%c0, %c0_0] : memref<8x128xf32, #tpu.memory_space<vmem>>, vector<8x128xf32>
    %c0_1 = arith.constant 0 : index
    %c0_2 = arith.constant 0 : index
    %1 = vector.load %arg2[%c0_1, %c0_2] : memref<128x128xf32, #tpu.memory_space<vmem>>, vector<128x128xf32>
    %cst = arith.constant dense<0.000000e+00> : vector<8x128xf32>
    %2 = tpu.matmul %0, %1, %cst {dimension_numbers = #tpu.dot_dimension_numbers<[1], [0], [0], [1], [0, 0, 1, 1], [], []>} : vector<8x128xf32>, vector<128x128xf32>, vector<8x128xf32> -> vector<8x128xf32>
    %c0_3 = arith.constant 0 : index
    %c0_4 = arith.constant 0 : index
    %3 = vector.load %arg3[%c0_3, %c0_4] : memref<1x128xf32, #tpu.memory_space<vmem>>, vector<1x128xf32>
    %4 = vector.broadcast %3 : vector<1x128xf32> to vector<8x128xf32>
    %5 = arith.addf %2, %4 : vector<8x128xf32>
    %cst_5 = arith.constant 0.000000e+00 : f32
    %6 = vector.broadcast %cst_5 : f32 to vector<8x128xf32>
    %7 = arith.maximumf %5, %6 : vector<8x128xf32>
    %c0_6 = arith.constant 0 : index
    %c0_7 = arith.constant 0 : index
    %8 = vector.load %arg4[%c0_6, %c0_7] : memref<128x128xf32, #tpu.memory_space<vmem>>, vector<128x128xf32>
    %cst_8 = arith.constant dense<0.000000e+00> : vector<8x128xf32>
    %9 = tpu.matmul %7, %8, %cst_8 {dimension_numbers = #tpu.dot_dimension_numbers<[1], [0], [0], [1], [0, 0, 1, 1], [], []>} : vector<8x128xf32>, vector<128x128xf32>, vector<8x128xf32> -> vector<8x128xf32>
    %c0_9 = arith.constant 0 : index
    %c0_10 = arith.constant 0 : index
    %10 = vector.load %arg5[%c0_9, %c0_10] : memref<1x128xf32, #tpu.memory_space<vmem>>, vector<1x128xf32>
    %11 = vector.broadcast %10 : vector<1x128xf32> to vector<8x128xf32>
    %12 = arith.addf %9, %11 : vector<8x128xf32>
    %cst_11 = arith.constant dense<0xFF800000> : vector<8xf32>
    %13 = vector.multi_reduction <maximumf>, %12, %cst_11 [1] : vector<8x128xf32> to vector<8xf32>
    %14 = vector.shape_cast %13 : vector<8xf32> to vector<8x1xf32>
    %15 = vector.broadcast %14 : vector<8x1xf32> to vector<8x128xf32>
    %16 = arith.subf %12, %15 : vector<8x128xf32>
    %17 = math.exp %16 : vector<8x128xf32>
    %cst_12 = arith.constant dense<0.000000e+00> : vector<8xf32>
    %18 = vector.multi_reduction <add>, %17, %cst_12 [1] : vector<8x128xf32> to vector<8xf32>
    %19 = vector.shape_cast %18 : vector<8xf32> to vector<8x1xf32>
    %20 = tpu.reciprocal %19 {approx = true} : vector<8x1xf32> -> vector<8x1xf32>
    %21 = vector.broadcast %20 : vector<8x1xf32> to vector<8x128xf32>
    %22 = arith.mulf %17, %21 : vector<8x128xf32>
    %c0_13 = arith.constant 0 : index
    %c0_14 = arith.constant 0 : index
    %23 = vector.load %arg6[%c0_13, %c0_14] : memref<8x128xf32, #tpu.memory_space<vmem>>, vector<8x128xf32>
    tpu.vector_store %arg6[%c0_13, %c0_14], %22 {strides = array<i32>} : memref<8x128xf32, #tpu.memory_space<vmem>>, vector<8x128xf32>,
    return
  }
  func.func @transform_0(%arg0: i32) -> (i32, i32) {
    %c0_i32 = arith.constant 0 : i32
    %c0_i32_0 = arith.constant 0 : i32
    return %arg0, %c0_i32 : i32, i32
  }
  func.func @transform_1(%arg0: i32) -> (i32, i32) {
    %c0_i32 = arith.constant 0 : i32
    %c0_i32_0 = arith.constant 0 : i32
    %c0_i32_1 = arith.constant 0 : i32
    return %c0_i32, %c0_i32_0 : i32, i32
  }
  func.func @transform_2(%arg0: i32) -> (i32, i32) {
    %c0_i32 = arith.constant 0 : i32
    %c0_i32_0 = arith.constant 0 : i32
    %c0_i32_1 = arith.constant 0 : i32
    return %c0_i32, %c0_i32_0 : i32, i32
  }
  func.func @transform_3(%arg0: i32) -> (i32, i32) {
    %c0_i32 = arith.constant 0 : i32
    %c0_i32_0 = arith.constant 0 : i32
    %c0_i32_1 = arith.constant 0 : i32
    return %c0_i32, %c0_i32_0 : i32, i32
  }
  func.func @transform_4(%arg0: i32) -> (i32, i32) {
    %c0_i32 = arith.constant 0 : i32
    %c0_i32_0 = arith.constant 0 : i32
    %c0_i32_1 = arith.constant 0 : i32
    return %c0_i32, %c0_i32_0 : i32, i32
  }
  func.func @transform_5(%arg0: i32) -> (i32, i32) {
    %c0_i32 = arith.constant 0 : i32
    %c0_i32_0 = arith.constant 0 : i32
    return %arg0, %c0_i32 : i32, i32
  }
}

</mosaic_0001>

<llo_original>
// kernel: imdb_model_forward.1
$region0: #{imdb_model_forward.1}
  #allocation0 [shape = 'u32[]', space=smem, size = 0x4, offset = 0x4, fixed_abs, tag = 'smem constant byte address 0x4 - core index']
  #allocation1 [shape = 'u32[144,128]{1,0:T(1,128)}', space=vmem, size = 0x12000, scoped, tag = 'internal scratch']
  %s0 = inlined_call_operand.vmem [shape: f32[8,128], index: 0, kind: input, shape index: {}]
  %s1 = inlined_call_operand.vmem [shape: f32[128,128], index: 1, kind: input, shape index: {}]
  %s2 = inlined_call_operand.vmem [shape: f32[1,128], index: 2, kind: input, shape index: {}]
  %s3 = inlined_call_operand.vmem [shape: f32[128,128], index: 3, kind: input, shape index: {}]
  %s4 = inlined_call_operand.vmem [shape: f32[1,128], index: 4, kind: input, shape index: {}]
  %s5 = inlined_call_operand.vmem [shape: f32[8,128], index: 5, kind: output, shape index: {}]
  %s6 = sld [smem:[#allocation0]]
  $region30: #{imdb_model_forward.1} parent=0
    _
  %s8 = ssub.s32 1, %s6
  %s9 = scalar_select 0, %s8, %s6
  // Predicated region
  $region2: #{imdb_model_forward.1} parent=0 // pred_check
    _
  $region3: #{imdb_model_forward.1} parent=0 // pred_check_branch
    %11 = sbr.rel (0) target = $region5
  $region4: #{imdb_model_forward.1} parent=0 // pred_region
    _
  $region5: #{imdb_model_forward.1} parent=0 // pred_fallthru
    _
  // Predicated region
  $region6: #{imdb_model_forward.1} parent=0 // pred_check
    _
  $region7: #{imdb_model_forward.1} parent=0 // pred_check_branch
    %13 = sbr.rel (0) target = $region9
  $region8: #{imdb_model_forward.1} parent=0 // pred_region
    _
  $region9: #{imdb_model_forward.1} parent=0 // pred_fallthru
    _
  // Predicated region
  $region10: #{imdb_model_forward.1} parent=0 // pred_check
    _
  $region11: #{imdb_model_forward.1} parent=0 // pred_check_branch
    %15 = sbr.rel (0) target = $region13
  $region12: #{imdb_model_forward.1} parent=0 // pred_region
    _
  $region13: #{imdb_model_forward.1} parent=0 // pred_fallthru
    _
  // Predicated region
  $region14: #{imdb_model_forward.1} parent=0 // pred_check
    _
  $region15: #{imdb_model_forward.1} parent=0 // pred_check_branch
    %17 = sbr.rel (0) target = $region17
  $region16: #{imdb_model_forward.1} parent=0 // pred_region
    _
  $region17: #{imdb_model_forward.1} parent=0 // pred_fallthru
    _
  // Predicated region
  $region18: #{imdb_model_forward.1} parent=0 // pred_check
    _
  $region19: #{imdb_model_forward.1} parent=0 // pred_check_branch
    %19 = sbr.rel (0) target = $region21
  $region20: #{imdb_model_forward.1} parent=0 // pred_region
    _
  $region21: #{imdb_model_forward.1} parent=0 // pred_fallthru
    _
  %v20 = vld [vmem:[%s0] sm:$0xff]
  %v21 = vld [vmem:[%s1] sm:$0xff]
  %v22 = vld [vmem:[%s1 + $0x8] sm:$0xff]
  %v23 = vld [vmem:[%s1 + $0x10] sm:$0xff]
  %v24 = vld [vmem:[%s1 + $0x18] sm:$0xff]
  %v25 = vld [vmem:[%s1 + $0x20] sm:$0xff]
  %v26 = vld [vmem:[%s1 + $0x28] sm:$0xff]
  %v27 = vld [vmem:[%s1 + $0x30] sm:$0xff]
  %v28 = vld [vmem:[%s1 + $0x38] sm:$0xff]
  %v29 = vld [vmem:[%s1 + $0x40] sm:$0xff]
  %v30 = vld [vmem:[%s1 + $0x48] sm:$0xff]
  %v31 = vld [vmem:[%s1 + $0x50] sm:$0xff]
  %v32 = vld [vmem:[%s1 + $0x58] sm:$0xff]
  %v33 = vld [vmem:[%s1 + $0x60] sm:$0xff]
  %v34 = vld [vmem:[%s1 + $0x68] sm:$0xff]
  %v35 = vld [vmem:[%s1 + $0x70] sm:$0xff]
  %v36 = vld [vmem:[%s1 + $0x78] sm:$0xff]
  %v37 = vld [vmem:[%s2] sm:$0x1]
  %v39 = vlaneseq
  %v40 = vshrl.u32 %v39, 7
  %v41 = vsub.s32 0, %v40
  %v42 = vrot.slane %v37, %v41
  %44 = vmatprep.subr.mxu0 0.0
  %45 = vmatpush1.msra.mxu0 %v36
  %46 = vmatprep.subr.mxu0 0.0
  %47 = vmatpush1.msra.mxu0 %v35
  %48 = vmatprep.subr.mxu0 0.0
  %49 = vmatpush1.msra.mxu0 %v34
  %50 = vmatprep.subr.mxu0 0.0
  %51 = vmatpush1.msra.mxu0 %v33
  %52 = vmatprep.subr.mxu0 0.0
  %53 = vmatpush1.msra.mxu0 %v32
  %54 = vmatprep.subr.mxu0 0.0
  %55 = vmatpush1.msra.mxu0 %v31
  %56 = vmatprep.subr.mxu0 0.0
  %57 = vmatpush1.msra.mxu0 %v30
  %58 = vmatprep.subr.mxu0 0.0
  %59 = vmatpush1.msra.mxu0 %v29
  %60 = vmatprep.subr.mxu0 0.0
  %61 = vmatpush1.msra.mxu0 %v28
  %62 = vmatprep.subr.mxu0 0.0
  %63 = vmatpush1.msra.mxu0 %v27
  %64 = vmatprep.subr.mxu0 0.0
  %65 = vmatpush1.msra.mxu0 %v26
  %66 = vmatprep.subr.mxu0 0.0
  %67 = vmatpush1.msra.mxu0 %v25
  %68 = vmatprep.subr.mxu0 0.0
  %69 = vmatpush1.msra.mxu0 %v24
  %70 = vmatprep.subr.mxu0 0.0
  %71 = vmatpush1.msra.mxu0 %v23
  %72 = vmatprep.subr.mxu0 0.0
  %73 = vmatpush1.msra.mxu0 %v22
  %74 = vmatprep.subr.mxu0 0.0
  %75 = vmatpush1.msra.mxu0 %v21
  %76 = vmatprep.subr.mxu0 0.0
  %77 = vmatpush2.msra.mxu0 0.0
  %78 = vmatprep.subr.mxu0 0.0
  %79 = vmatpush2.msra.mxu0 0.0
  %80 = vmatprep.subr.mxu0 0.0
  %81 = vmatpush2.msra.mxu0 0.0
  %82 = vmatprep.subr.mxu0 0.0
  %83 = vmatpush2.msra.mxu0 0.0
  %84 = vmatprep.subr.mxu0 0.0
  %85 = vmatpush2.msra.mxu0 0.0
  %86 = vmatprep.subr.mxu0 0.0
  %87 = vmatpush2.msra.mxu0 0.0
  %88 = vmatprep.subr.mxu0 0.0
  %89 = vmatpush2.msra.mxu0 0.0
  %90 = vmatprep.subr.mxu0 0.0
  %91 = vmatpush2.msra.mxu0 0.0
  %92 = vmatprep.subr.mxu0 0.0
  %93 = vmatpush2.msra.mxu0 0.0
  %94 = vmatprep.subr.mxu0 0.0
  %95 = vmatpush2.msra.mxu0 0.0
  %96 = vmatprep.subr.mxu0 0.0
  %97 = vmatpush2.msra.mxu0 0.0
  %98 = vmatprep.subr.mxu0 0.0
  %99 = vmatpush2.msra.mxu0 0.0
  %100 = vmatprep.subr.mxu0 0.0
  %101 = vmatpush2.msra.mxu0 0.0
  %102 = vmatprep.subr.mxu0 0.0
  %103 = vmatpush2.msra.mxu0 0.0
  %104 = vmatprep.subr.mxu0 0.0
  %105 = vmatpush2.msra.mxu0 0.0
  %106 = vmatprep.subr.mxu0 0.0
  %107 = vmatpush2.msra.mxu0 0.0
  %108 = vmatprep.mubr.f32.mxu0 0.0
  %109 = vmatmul.mubr.f32.gmra.mxu0 %v20
  %v110 = vpop.f32.mrf.mxu0
  %v111 = vadd.f32 %v42, %v110
  %v112 = vpop.f32.mrf.mxu0
  %113 = vdwg.mxu0
  %v114 = vmax.f32 %v111, 0.0
  %v115 = vld [vmem:[%s3] sm:$0xff]
  %v116 = vld [vmem:[%s3 + $0x8] sm:$0xff]
  %v117 = vld [vmem:[%s3 + $0x10] sm:$0xff]
  %v118 = vld [vmem:[%s3 + $0x18] sm:$0xff]
  %v119 = vld [vmem:[%s3 + $0x20] sm:$0xff]
  %v120 = vld [vmem:[%s3 + $0x28] sm:$0xff]
  %v121 = vld [vmem:[%s3 + $0x30] sm:$0xff]
  %v122 = vld [vmem:[%s3 + $0x38] sm:$0xff]
  %v123 = vld [vmem:[%s3 + $0x40] sm:$0xff]
  %v124 = vld [vmem:[%s3 + $0x48] sm:$0xff]
  %v125 = vld [vmem:[%s3 + $0x50] sm:$0xff]
  %v126 = vld [vmem:[%s3 + $0x58] sm:$0xff]
  %v127 = vld [vmem:[%s3 + $0x60] sm:$0xff]
  %v128 = vld [vmem:[%s3 + $0x68] sm:$0xff]
  %v129 = vld [vmem:[%s3 + $0x70] sm:$0xff]
  %v130 = vld [vmem:[%s3 + $0x78] sm:$0xff]
  %v131 = vld [vmem:[%s4] sm:$0x1]
  %v133 = vlaneseq
  %v134 = vshrl.u32 %v133, 7
  %v135 = vsub.s32 0, %v134
  %v136 = vrot.slane %v131, %v135
  %138 = vmatprep.subr.mxu0 0.0
  %139 = vmatpush1.msra.mxu0 %v130
  %140 = vmatprep.subr.mxu0 0.0
  %141 = vmatpush1.msra.mxu0 %v129
  %142 = vmatprep.subr.mxu0 0.0
  %143 = vmatpush1.msra.mxu0 %v128
  %144 = vmatprep.subr.mxu0 0.0
  %145 = vmatpush1.msra.mxu0 %v127
  %146 = vmatprep.subr.mxu0 0.0
  %147 = vmatpush1.msra.mxu0 %v126
  %148 = vmatprep.subr.mxu0 0.0
  %149 = vmatpush1.msra.mxu0 %v125
  %150 = vmatprep.subr.mxu0 0.0
  %151 = vmatpush1.msra.mxu0 %v124
  %152 = vmatprep.subr.mxu0 0.0
  %153 = vmatpush1.msra.mxu0 %v123
  %154 = vmatprep.subr.mxu0 0.0
  %155 = vmatpush1.msra.mxu0 %v122
  %156 = vmatprep.subr.mxu0 0.0
  %157 = vmatpush1.msra.mxu0 %v121
  %158 = vmatprep.subr.mxu0 0.0
  %159 = vmatpush1.msra.mxu0 %v120
  %160 = vmatprep.subr.mxu0 0.0
  %161 = vmatpush1.msra.mxu0 %v119
  %162 = vmatprep.subr.mxu0 0.0
  %163 = vmatpush1.msra.mxu0 %v118
  %164 = vmatprep.subr.mxu0 0.0
  %165 = vmatpush1.msra.mxu0 %v117
  %166 = vmatprep.subr.mxu0 0.0
  %167 = vmatpush1.msra.mxu0 %v116
  %168 = vmatprep.subr.mxu0 0.0
  %169 = vmatpush1.msra.mxu0 %v115
  %170 = vmatprep.subr.mxu0 0.0
  %171 = vmatpush2.msra.mxu0 0.0
  %172 = vmatprep.subr.mxu0 0.0
  %173 = vmatpush2.msra.mxu0 0.0
  %174 = vmatprep.subr.mxu0 0.0
  %175 = vmatpush2.msra.mxu0 0.0
  %176 = vmatprep.subr.mxu0 0.0
  %177 = vmatpush2.msra.mxu0 0.0
  %178 = vmatprep.subr.mxu0 0.0
  %179 = vmatpush2.msra.mxu0 0.0
  %180 = vmatprep.subr.mxu0 0.0
  %181 = vmatpush2.msra.mxu0 0.0
  %182 = vmatprep.subr.mxu0 0.0
  %183 = vmatpush2.msra.mxu0 0.0
  %184 = vmatprep.subr.mxu0 0.0
  %185 = vmatpush2.msra.mxu0 0.0
  %186 = vmatprep.subr.mxu0 0.0
  %187 = vmatpush2.msra.mxu0 0.0
  %188 = vmatprep.subr.mxu0 0.0
  %189 = vmatpush2.msra.mxu0 0.0
  %190 = vmatprep.subr.mxu0 0.0
  %191 = vmatpush2.msra.mxu0 0.0
  %192 = vmatprep.subr.mxu0 0.0
  %193 = vmatpush2.msra.mxu0 0.0
  %194 = vmatprep.subr.mxu0 0.0
  %195 = vmatpush2.msra.mxu0 0.0
  %196 = vmatprep.subr.mxu0 0.0
  %197 = vmatpush2.msra.mxu0 0.0
  %198 = vmatprep.subr.mxu0 0.0
  %199 = vmatpush2.msra.mxu0 0.0
  %200 = vmatprep.subr.mxu0 0.0
  %201 = vmatpush2.msra.mxu0 0.0
  %202 = vmatprep.mubr.f32.mxu0 0.0
  %203 = vmatmul.mubr.f32.gmra.mxu0 %v114
  %v204 = vpop.f32.mrf.mxu0
  %v205 = vadd.f32 %v136, %v204
  %v206 = vpop.f32.mrf.mxu0
  %207 = vdwg.mxu0
  %208 = vmax.xlane.f32.xlu0 %v205
  %v209 = vpop.xlane.xlu0 %208
  %v210 = vsub.f32 %v205, %v209
  %v211 = vmul.f32 %v210, 1.442695
  %v212 = vpow.pop %v211
  %213 = vadd.xlane.f32.xlu0 %v212
  %v214 = vpop.xlane.xlu0 %213
  %v215 = vrcp.pop %v214
  %v216 = vmul.f32 %v212, %v215
  %217 = vst [vmem:[%s5] sm:$0xff] %v216
  // Predicated region
  $region22: #{imdb_model_forward.1} parent=0 // pred_check
    _
  $region23: #{imdb_model_forward.1} parent=0 // pred_check_branch
    %219 = sbr.rel (0) target = $region25
  $region24: #{imdb_model_forward.1} parent=0 // pred_region
    _
  $region25: #{imdb_model_forward.1} parent=0 // pred_fallthru
    _
  // Predicated region
  $region26: #{imdb_model_forward.1} parent=0 // pred_check
    _
  $region27: #{imdb_model_forward.1} parent=0 // pred_check_branch
    %221 = sbr.rel (0) target = $region29
  $region28: #{imdb_model_forward.1} parent=0 // pred_region
    _
  $region29: #{imdb_model_forward.1} parent=0 // pred_fallthru
    _

</llo_original>
